<compile_context>
chip_gen: v7x
topology: tpu7x:2x2x1
jax: 0.10.0
libtpu: 0.0.40
codegen_flags: <defaults>
</compile_context>

<pallas_src>
import jax
import jax.numpy as jnp
from jax.experimental import pallas as pl
from jax.experimental.pallas import tpu as pltpu

Ni, Nh1, Nh2, No = 2, 24, 12, 2

# Slab layout (f32, zero-padded to (40, 128) = 5 sublane groups x 1 lane group):
#   rows [0, Nh1)           : cols [0, Ni)  = W1 (Nh1,Ni),  col Ni  = b1
#   rows [Nh1, Nh1+Nh2)     : cols [0, Nh1) = W2 (Nh2,Nh1), col Nh1 = b2
#   rows [Nh1+Nh2, ..+No)   : cols [0, Nh2) = W3 (No,Nh2),  col Nh2 = b3
_R_W2 = Nh1
_R_W3 = Nh1 + Nh2
_SLAB_ROWS = 40
_SLAB_COLS = 128


def mlp_kernel(x_ref, p_ref, o_ref, h_ref=None):
    slab = p_ref[...]
    w1 = slab[0:Nh1, 0:Ni]                        # (Nh1, Ni)
    b1 = slab[0:Nh1, Ni:Ni + 1]                   # (Nh1, 1)
    w2 = slab[_R_W2:_R_W2 + Nh2, 0:Nh1]           # (Nh2, Nh1)
    b2 = slab[_R_W2:_R_W2 + Nh2, Nh1:Nh1 + 1]     # (Nh2, 1)
    w3 = slab[_R_W3:_R_W3 + No, 0:Nh2]            # (No, Nh2)
    b3 = slab[_R_W3:_R_W3 + No, Nh2:Nh2 + 1]      # (No, 1)

    xT = x_ref[...]                               # (Ni, TB)  batch on lanes

    # fc1: contraction depth Ni=2 -> VPU broadcast-FMA (two outer products);
    # skips the vmatmul push/pop latency and keeps the MXU slot free.
    h1 = w1[:, 0:1] * xT[0:1, :] + w1[:, 1:2] * xT[1:2, :]        # (Nh1, TB)
    h1 = jax.nn.sigmoid(h1 + b1)

    # fc2 / fc3: K = 24 / 12 -> MXU with f32 accumulation.
    # (kept f32 end-to-end for exactness; bf16 operands are a v6e/v7x option)
    h2 = jax.nn.sigmoid(
        jnp.dot(w2, h1, preferred_element_type=jnp.float32) + b2)     # (Nh2, TB)
    out = jnp.dot(w3, h2, preferred_element_type=jnp.float32) + b3    # (No, TB)

    o_ref[...] = out.astype(o_ref.dtype)
    if h_ref is not None:                         # additional_out=True variant
        h_ref[...] = h2.astype(h_ref.dtype)


def pack_params(params):
    """Coalesce the 6 tiny tensors into one padded slab -> single input DMA."""
    slab = jnp.zeros((_SLAB_ROWS, _SLAB_COLS), jnp.float32)
    slab = slab.at[0:Nh1, 0:Ni].set(params["w1"].astype(jnp.float32))
    slab = slab.at[0:Nh1, Ni].set(params["b1"].astype(jnp.float32))
    slab = slab.at[_R_W2:_R_W2 + Nh2, 0:Nh1].set(params["w2"].astype(jnp.float32))
    slab = slab.at[_R_W2:_R_W2 + Nh2, Nh1].set(params["b2"].astype(jnp.float32))
    slab = slab.at[_R_W3:_R_W3 + No, 0:Nh2].set(params["w3"].astype(jnp.float32))
    slab = slab.at[_R_W3:_R_W3 + No, Nh2].set(params["b3"].astype(jnp.float32))
    return slab


def net_forward(x, params, additional_out=False, tb_max=2048):
    """x: (B, Ni) float32. params: PyTorch-convention (out,in) weights / (out,) biases."""
    B = x.shape[0]
    xT = jnp.asarray(x, jnp.float32).T            # (Ni, B): batch -> lane axis
    if B <= tb_max:
        TB, B_pad = B, B                          # block == full dim, always legal
    else:
        TB = tb_max                               # multiple of 128 -> legal lane tile
        B_pad = pl.cdiv(B, TB) * TB
        xT = jnp.pad(xT, ((0, 0), (0, B_pad - B)))
    slab = pack_params(params)

    out_shape = jax.ShapeDtypeStruct((No, B_pad), jnp.float32)
    out_specs = pl.BlockSpec((No, TB), lambda i: (0, i))
    if additional_out:
        out_shape = (out_shape, jax.ShapeDtypeStruct((Nh2, B_pad), jnp.float32))
        out_specs = (out_specs, pl.BlockSpec((Nh2, TB), lambda i: (0, i)))

    res = pl.pallas_call(
        mlp_kernel,
        out_shape=out_shape,
        grid=(B_pad // TB,),
        in_specs=[
            pl.BlockSpec((Ni, TB), lambda i: (0, i)),                  # x tiled over batch
            pl.BlockSpec((_SLAB_ROWS, _SLAB_COLS), lambda i: (0, 0)),  # weights VMEM-resident
        ],
        out_specs=out_specs,
        compiler_params=pltpu.CompilerParams(
            dimension_semantics=("parallel",),   # shard batch tiles across TCs (v7x megacore)
            vmem_limit_bytes=32 * 1024 * 1024,   # explicit, v7x-safe budget
        ),
    )(xT, slab)

    if additional_out:
        out, h2 = res
        return out[:, :B].T, h2[:, :B].T
    return res[:, :B].T


def init_params(key):
    """Deterministic init mimicking nn.Linear's U(-1/sqrt(fan_in), 1/sqrt(fan_in))."""
    ks = jax.random.split(key, 6)

    def lin(kw, kb, fan_in, fan_out):
        bound = 1.0 / jnp.sqrt(fan_in)
        w = jax.random.uniform(kw, (fan_out, fan_in), jnp.float32, -bound, bound)
        b = jax.random.uniform(kb, (fan_out,), jnp.float32, -bound, bound)
        return w, b

    w1, b1 = lin(ks[0], ks[1], Ni, Nh1)
    w2, b2 = lin(ks[2], ks[3], Nh1, Nh2)
    w3, b3 = lin(ks[4], ks[5], Nh2, No)
    return {"w1": w1, "b1": b1, "w2": w2, "b2": b2, "w3": w3, "b3": b3}


def reference_forward(x, p):
    h1 = jax.nn.sigmoid(x @ p["w1"].T + p["b1"])
    h2 = jax.nn.sigmoid(h1 @ p["w2"].T + p["b2"])
    return h2 @ p["w3"].T + p["b3"], h2


if __name__ == "__main__":
    key = jax.random.PRNGKey(0)
    k_param, k_x = jax.random.split(key)
    params = init_params(k_param)
    x = jax.random.normal(k_x, (8, Ni), jnp.float32)   # batch=8, Ni=2

    ref_out, ref_h2 = reference_forward(x, params)

    out = jax.block_until_ready(net_forward(x, params))
    assert out.shape == (8, No)
    assert jnp.allclose(out, ref_out, atol=1e-5, rtol=1e-5), "mismatch vs reference"

    out2, hid = net_forward(x, params, additional_out=True)
    out2, hid = jax.block_until_ready((out2, hid))
    assert hid.shape == (8, Nh2)
    assert jnp.allclose(out2, ref_out, atol=1e-5, rtol=1e-5), "mismatch vs reference (out)"
    assert jnp.allclose(hid, ref_h2, atol=1e-5, rtol=1e-5), "mismatch vs reference (hidden)"

    print("KERNEL_OK")
</pallas_src>

<mosaic_0001>
module attributes {stable_mosaic.version = 11 : i64} {
  func.func @mlp_kernel(%arg0: i32, %arg1: memref<2x8xf32, #tpu.memory_space<vmem>>, %arg2: memref<40x128xf32, #tpu.memory_space<vmem>>, %arg3: memref<2x8xf32, #tpu.memory_space<vmem>>) attributes {dimension_semantics = [#tpu.dimension_semantics<parallel>], iteration_bounds = array<i64: 1>, scalar_prefetch = 0 : i64, scratch_operands = 0 : i64, tpu.core_type = #tpu.core_type<tc>, window_params = [{transform_indices = @transform_0, window_bounds = array<i64: 2, 8>}, {pipeline_mode = #tpu.pipeline_mode<synchronous>, transform_indices = @transform_1, window_bounds = array<i64: 40, 128>}, {transform_indices = @transform_2, window_bounds = array<i64: 2, 8>}]} {
    %c0 = arith.constant 0 : index
    %c0_0 = arith.constant 0 : index
    %0 = vector.load %arg2[%c0, %c0_0] : memref<40x128xf32, #tpu.memory_space<vmem>>, vector<40x128xf32>
    %1 = vector.extract_strided_slice %0 {offsets = [0, 0], sizes = [24, 2], strides = [1, 1]} : vector<40x128xf32> to vector<24x2xf32>
    %2 = vector.extract_strided_slice %0 {offsets = [0, 2], sizes = [24, 1], strides = [1, 1]} : vector<40x128xf32> to vector<24x1xf32>
    %3 = vector.extract_strided_slice %0 {offsets = [24, 0], sizes = [12, 24], strides = [1, 1]} : vector<40x128xf32> to vector<12x24xf32>
    %4 = vector.extract_strided_slice %0 {offsets = [24, 24], sizes = [12, 1], strides = [1, 1]} : vector<40x128xf32> to vector<12x1xf32>
    %5 = vector.extract_strided_slice %0 {offsets = [36, 0], sizes = [2, 12], strides = [1, 1]} : vector<40x128xf32> to vector<2x12xf32>
    %6 = vector.extract_strided_slice %0 {offsets = [36, 12], sizes = [2, 1], strides = [1, 1]} : vector<40x128xf32> to vector<2x1xf32>
    %c0_1 = arith.constant 0 : index
    %c0_2 = arith.constant 0 : index
    %7 = vector.load %arg1[%c0_1, %c0_2] : memref<2x8xf32, #tpu.memory_space<vmem>>, vector<2x8xf32>
    %8 = vector.extract_strided_slice %1 {offsets = [0, 0], sizes = [24, 1], strides = [1, 1]} : vector<24x2xf32> to vector<24x1xf32>
    %9 = vector.extract_strided_slice %7 {offsets = [0, 0], sizes = [1, 8], strides = [1, 1]} : vector<2x8xf32> to vector<1x8xf32>
    %10 = vector.broadcast %8 : vector<24x1xf32> to vector<24x8xf32>
    %11 = vector.broadcast %9 : vector<1x8xf32> to vector<24x8xf32>
    %12 = arith.mulf %10, %11 : vector<24x8xf32>
    %13 = vector.extract_strided_slice %1 {offsets = [0, 1], sizes = [24, 1], strides = [1, 1]} : vector<24x2xf32> to vector<24x1xf32>
    %14 = vector.extract_strided_slice %7 {offsets = [1, 0], sizes = [1, 8], strides = [1, 1]} : vector<2x8xf32> to vector<1x8xf32>
    %15 = vector.broadcast %13 : vector<24x1xf32> to vector<24x8xf32>
    %16 = vector.broadcast %14 : vector<1x8xf32> to vector<24x8xf32>
    %17 = arith.mulf %15, %16 : vector<24x8xf32>
    %18 = arith.addf %12, %17 : vector<24x8xf32>
    %19 = vector.broadcast %2 : vector<24x1xf32> to vector<24x8xf32>
    %20 = arith.addf %18, %19 : vector<24x8xf32>
    %21 = arith.negf %20 : vector<24x8xf32>
    %22 = math.exp %21 : vector<24x8xf32>
    %cst = arith.constant 1.000000e+00 : f32
    %23 = vector.broadcast %cst : f32 to vector<24x8xf32>
    %24 = arith.addf %23, %22 : vector<24x8xf32>
    %25 = arith.divf %23, %24 : vector<24x8xf32>
    %cst_3 = arith.constant dense<0.000000e+00> : vector<12x8xf32>
    %26 = tpu.matmul %3, %25, %cst_3 {dimension_numbers = #tpu.dot_dimension_numbers<[1], [0], [0], [1], [0, 0, 1, 1], [], []>} : vector<12x24xf32>, vector<24x8xf32>, vector<12x8xf32> -> vector<12x8xf32>
    %27 = vector.broadcast %4 : vector<12x1xf32> to vector<12x8xf32>
    %28 = arith.addf %26, %27 : vector<12x8xf32>
    %29 = arith.negf %28 : vector<12x8xf32>
    %30 = math.exp %29 : vector<12x8xf32>
    %cst_4 = arith.constant 1.000000e+00 : f32
    %31 = vector.broadcast %cst_4 : f32 to vector<12x8xf32>
    %32 = arith.addf %31, %30 : vector<12x8xf32>
    %33 = arith.divf %31, %32 : vector<12x8xf32>
    %cst_5 = arith.constant dense<0.000000e+00> : vector<2x8xf32>
    %34 = tpu.matmul %5, %33, %cst_5 {dimension_numbers = #tpu.dot_dimension_numbers<[1], [0], [0], [1], [0, 0, 1, 1], [], []>} : vector<2x12xf32>, vector<12x8xf32>, vector<2x8xf32> -> vector<2x8xf32>
    %35 = vector.broadcast %6 : vector<2x1xf32> to vector<2x8xf32>
    %36 = arith.addf %34, %35 : vector<2x8xf32>
    %c0_6 = arith.constant 0 : index
    %c0_7 = arith.constant 0 : index
    %37 = vector.load %arg3[%c0_6, %c0_7] : memref<2x8xf32, #tpu.memory_space<vmem>>, vector<2x8xf32>
    tpu.vector_store %arg3[%c0_6, %c0_7], %36 {strides = array<i32>} : memref<2x8xf32, #tpu.memory_space<vmem>>, vector<2x8xf32>,
    return
  }
  func.func @transform_0(%arg0: i32) -> (i32, i32) {
    %c0_i32 = arith.constant 0 : i32
    %c0_i32_0 = arith.constant 0 : i32
    return %c0_i32, %arg0 : i32, i32
  }
  func.func @transform_1(%arg0: i32) -> (i32, i32) {
    %c0_i32 = arith.constant 0 : i32
    %c0_i32_0 = arith.constant 0 : i32
    %c0_i32_1 = arith.constant 0 : i32
    return %c0_i32, %c0_i32_0 : i32, i32
  }
  func.func @transform_2(%arg0: i32) -> (i32, i32) {
    %c0_i32 = arith.constant 0 : i32
    %c0_i32_0 = arith.constant 0 : i32
    return %c0_i32, %arg0 : i32, i32
  }
}

</mosaic_0001>

<llo_original>
// kernel: tpu_custom_call.1
$region0: #{tpu_custom_call.1}
  #allocation0 [shape = 'u32[]', space=smem, size = 0x4, offset = 0x4, fixed_abs, tag = 'smem constant byte address 0x4 - core index']
  #allocation1 [shape = 'u32[144,128]{1,0:T(1,128)}', space=vmem, size = 0x12000, scoped, tag = 'internal scratch']
  %s0 = inlined_call_operand.hbm [shape: f32[2,8], index: 0, kind: input, shape index: {}]
  %s1 = inlined_call_operand.hbm [shape: f32[40,128], index: 1, kind: input, shape index: {}]
  %s2 = inlined_call_operand.hbm [shape: f32[2,8], index: 2, kind: output, shape index: {}]
  %s3 = sld [smem:[#allocation0]]
  $region26: #{tpu_custom_call.1} parent=0
    _
  %s5 = ssub.s32 1, %s3
  %s6 = scalar_select 0, %s5, %s3
  $region1: #{tpu_custom_call.1} parent=0
    #allocation2 [shape = 'u8[1024]{0}', space=vmem, size = 0x400, scoped, tag = 'input window, operand 0, single buffered']
    #allocation3 [shape = 's32[1]{0}', space=sflag, size = 0x4, scoped, tag = 'scoped memory for tpu_custom_call.1']
    #allocation4 [shape = 's32[1]{0}', space=sflag, size = 0x4, scoped, tag = 'scoped memory for tpu_custom_call.1']
    #allocation5 [shape = 'u8[20480]{0}', space=vmem, size = 0x5000, scoped, tag = 'input window, operand 1, single buffered']
    #allocation6 [shape = 's32[1]{0}', space=sflag, size = 0x4, scoped, tag = 'scoped memory for tpu_custom_call.1']
    #allocation7 [shape = 'u8[1024]{0}', space=vmem, size = 0x400, scoped, tag = 'output window, operand 0, single buffered']
    %7 = vsyncpa [#allocation3], 0
    %8 = vsyncpa [#allocation6], 0
    %9 = vsyncpa [#allocation4], 0
    // Predicated region
    $region2: #{tpu_custom_call.1} parent=1 // pred_check
      _
    $region3: #{tpu_custom_call.1} parent=1 // pred_check_branch
      %11 = sbr.rel (0) target = $region5
    $region4: #{tpu_custom_call.1} parent=1 // pred_region
      %s13 = ssub.s32 32, 32
      %14 = vsyncadd [#allocation3], %s13
      %s16 = sshll.u32 [#allocation2], 4
      %s17 = int_to_ptr.vmem [resolvable:$true] %s16
      %19 = dma.hbm_to_vmem [thread:$0]  %s0, 32, %s17, [#allocation3]
    $region5: #{tpu_custom_call.1} parent=1 // pred_fallthru
      _
    // Predicated region
    $region6: #{tpu_custom_call.1} parent=1 // pred_check
      _
    $region7: #{tpu_custom_call.1} parent=1 // pred_check_branch
      %21 = sbr.rel (0) target = $region9
    $region8: #{tpu_custom_call.1} parent=1 // pred_region
      %s23 = ssub.s32 640, 640
      %24 = vsyncadd [#allocation6], %s23
      %s25 = sshll.u32 [#allocation5], 4
      %s26 = int_to_ptr.vmem [resolvable:$true] %s25
      %31 = dma.hbm_to_vmem [thread:$0]  %s1, 640, %s26, [#allocation6], 128, 128, 8
    $region9: #{tpu_custom_call.1} parent=1 // pred_fallthru
      _
    // Predicated region
    $region10: #{tpu_custom_call.1} parent=1 // pred_check
      _
    $region11: #{tpu_custom_call.1} parent=1 // pred_check_branch
      %33 = sbr.rel (0) target = $region13
    $region12: #{tpu_custom_call.1} parent=1 // pred_region
      %34 = dma.done [#allocation3], 32
    $region13: #{tpu_custom_call.1} parent=1 // pred_fallthru
      _
    // Predicated region
    $region14: #{tpu_custom_call.1} parent=1 // pred_check
      _
    $region15: #{tpu_custom_call.1} parent=1 // pred_check_branch
      %36 = sbr.rel (0) target = $region17
    $region16: #{tpu_custom_call.1} parent=1 // pred_region
      %37 = dma.done [#allocation6], 640
    $region17: #{tpu_custom_call.1} parent=1 // pred_fallthru
      _
    %v38 = vld [vmem:[#allocation5] sm:$0xff]
    %v39 = vld [vmem:[#allocation5 + $0x8] sm:$0xff]
    %v40 = vld [vmem:[#allocation5 + $0x10] sm:$0xff]
    %v41 = vld [vmem:[#allocation5 + $0x18] sm:$0xff]
    %v42 = vld [vmem:[#allocation5 + $0x20] sm:$0xff]
    %v43 = vld [vmem:[#allocation2] sm:$0x3]
    %45 = vset.pattern.permute.xlu0 0
    %46 = vperm.xlu0 %45, %v38
    %v47 = vpop.permute.xlu0 %46
    %50 = vset.pattern.permute.xlu0 0
    %51 = vperm.xlu0 %50, %v39
    %v52 = vpop.permute.xlu0 %51
    %55 = vset.pattern.permute.xlu0 0
    %56 = vperm.xlu0 %55, %v40
    %v57 = vpop.permute.xlu0 %56
    %v59 = vlaneseq
    %v60 = vshrl.u32 %v59, 7
    %v61 = vsub.s32 0, %v60
    %v62 = vrot.slane %v43, %v61
    %v63 = vmul.f32 %v47, %v62
    %v64 = vmul.f32 %v52, %v62
    %v65 = vmul.f32 %v57, %v62
    %66 = vset.pattern.permute.xlu0 1
    %67 = vperm.xlu0 %66, %v38
    %v68 = vpop.permute.xlu0 %67
    %70 = vset.pattern.permute.xlu0 1
    %71 = vperm.xlu0 %70, %v39
    %v72 = vpop.permute.xlu0 %71
    %74 = vset.pattern.permute.xlu0 1
    %75 = vperm.xlu0 %74, %v40
    %v76 = vpop.permute.xlu0 %75
    %v78 = vlaneseq
    %v79 = vshrl.u32 %v78, 7
    %v80 = vsub.s32 1, %v79
    %v81 = vrot.slane %v43, %v80
    %v82 = vmul.f32 %v68, %v81
    %v83 = vmul.f32 %v72, %v81
    %v84 = vmul.f32 %v76, %v81
    %v85 = vadd.f32 %v63, %v82
    %v86 = vadd.f32 %v64, %v83
    %v87 = vadd.f32 %v65, %v84
    %88 = vset.pattern.permute.xlu0 2
    %89 = vperm.xlu0 %88, %v38
    %v90 = vpop.permute.xlu0 %89
    %92 = vset.pattern.permute.xlu0 2
    %93 = vperm.xlu0 %92, %v39
    %v94 = vpop.permute.xlu0 %93
    %96 = vset.pattern.permute.xlu0 2
    %97 = vperm.xlu0 %96, %v40
    %v98 = vpop.permute.xlu0 %97
    %v100 = vadd.f32 %v85, %v90
    %v101 = vadd.f32 %v86, %v94
    %v102 = vadd.f32 %v87, %v98
    %v103 = vxor.u32 %v100, 2147483648
    %v104 = vxor.u32 %v101, 2147483648
    %v105 = vxor.u32 %v102, 2147483648
    %v106 = vmul.f32 %v103, 1.442695
    %v107 = vpow.pop %v106
    %v108 = vmul.f32 %v104, 1.442695
    %v109 = vpow.pop %v108
    %v110 = vmul.f32 %v105, 1.442695
    %v111 = vpow.pop %v110
    %v112 = vadd.f32 %v107, 1.0
    %v113 = vadd.f32 %v109, 1.0
    %v114 = vadd.f32 %v111, 1.0
    %v115 = vrcp.pop %v112
    %v116 = vmul.f32 1.0, %v115
    %v117 = vrcp.pop %v113
    %v118 = vmul.f32 1.0, %v117
    %v119 = vrcp.pop %v114
    %v120 = vmul.f32 1.0, %v119
    %122 = vset.pattern.permute.xlu0 24
    %123 = vperm.xlu0 %122, %v41
    %v124 = vpop.permute.xlu0 %123
    %127 = vset.pattern.permute.xlu0 24
    %128 = vperm.xlu0 %127, %v42
    %v129 = vpop.permute.xlu0 %128
    %vm131 = vcmask 195584
    %v132 = vsel %vm131, %v41, 0
    %v134 = vsel %vm131, %v42, 0
    %136 = vmatprep.subr.mxu0 0.0
    %137 = vmatpush1.msra.mxu0 %v116
    %138 = vmatprep.subr.mxu0 0.0
    %139 = vmatpush1.msra.mxu0 %v118
    %140 = vmatprep.subr.mxu0 0.0
    %141 = vmatpush1.msra.mxu0 %v120
    %142 = vmatprep.subr.mxu0 0.0
    %143 = vmatpush1.msra.mxu0 0.0
    %144 = vmatprep.subr.mxu0 0.0
    %145 = vmatpush1.msra.mxu0 0.0
    %146 = vmatprep.subr.mxu0 0.0
    %147 = vmatpush1.msra.mxu0 0.0
    %148 = vmatprep.subr.mxu0 0.0
    %149 = vmatpush1.msra.mxu0 0.0
    %150 = vmatprep.subr.mxu0 0.0
    %151 = vmatpush1.msra.mxu0 0.0
    %152 = vmatprep.subr.mxu0 0.0
    %153 = vmatpush1.msra.mxu0 0.0
    %154 = vmatprep.subr.mxu0 0.0
    %155 = vmatpush1.msra.mxu0 0.0
    %156 = vmatprep.subr.mxu0 0.0
    %157 = vmatpush1.msra.mxu0 0.0
    %158 = vmatprep.subr.mxu0 0.0
    %159 = vmatpush1.msra.mxu0 0.0
    %160 = vmatprep.subr.mxu0 0.0
    %161 = vmatpush1.msra.mxu0 0.0
    %162 = vmatprep.subr.mxu0 0.0
    %163 = vmatpush1.msra.mxu0 0.0
    %164 = vmatprep.subr.mxu0 0.0
    %165 = vmatpush1.msra.mxu0 0.0
    %166 = vmatprep.subr.mxu0 0.0
    %167 = vmatpush1.msra.mxu0 0.0
    %168 = vmatprep.subr.mxu0 0.0
    %169 = vmatpush1.msra.mxu0 0.0
    %170 = vmatprep.subr.mxu0 0.0
    %171 = vmatpush1.msra.mxu0 0.0
    %172 = vmatprep.subr.mxu0 0.0
    %173 = vmatpush1.msra.mxu0 0.0
    %174 = vmatprep.subr.mxu0 0.0
    %175 = vmatpush1.msra.mxu0 0.0
    %176 = vmatprep.subr.mxu0 0.0
    %177 = vmatpush1.msra.mxu0 0.0
    %178 = vmatprep.subr.mxu0 0.0
    %179 = vmatpush1.msra.mxu0 0.0
    %180 = vmatprep.subr.mxu0 0.0
    %181 = vmatpush1.msra.mxu0 0.0
    %182 = vmatprep.subr.mxu0 0.0
    %183 = vmatpush1.msra.mxu0 0.0
    %184 = vmatprep.subr.mxu0 0.0
    %185 = vmatpush1.msra.mxu0 0.0
    %186 = vmatprep.subr.mxu0 0.0
    %187 = vmatpush1.msra.mxu0 0.0
    %188 = vmatprep.subr.mxu0 0.0
    %189 = vmatpush1.msra.mxu0 0.0
    %190 = vmatprep.subr.mxu0 0.0
    %191 = vmatpush1.msra.mxu0 0.0
    %192 = vmatprep.subr.mxu0 0.0
    %193 = vmatpush1.msra.mxu0 0.0
    %194 = vmatprep.subr.mxu0 0.0
    %195 = vmatpush1.msra.mxu0 0.0
    %196 = vmatprep.subr.mxu0 0.0
    %197 = vmatpush1.msra.mxu0 0.0
    %198 = vmatprep.subr.mxu0 0.0
    %199 = vmatpush1.msra.mxu0 0.0
    %200 = vmatprep.mubr.f32.mxu0 0.0
    %201 = vmatmul.mubr.f32.gmra.mrb[0].mxu0 %v132
    %v202 = vpop.f32.mrb[0].mxu0
    %v203 = vadd.f32 %v124, %v202
    %v204 = vpop.f32.mrb[0].mxu0
    %205 = vmatprep.mubr.f32.mxu0 0.0
    %206 = vmatmul.mubr.f32.gmra.mrb[0].mxu0 %v134
    %v207 = vpop.f32.mrb[0].mxu0
    %v208 = vadd.f32 %v129, %v207
    %v209 = vpop.f32.mrb[0].mxu0
    %210 = vdwg.mxu0
    %v211 = vxor.u32 %v203, 2147483648
    %v212 = vxor.u32 %v208, 2147483648
    %v213 = vmul.f32 %v211, 1.442695
    %v214 = vpow.pop %v213
    %v215 = vmul.f32 %v212, 1.442695
    %v216 = vpow.pop %v215
    %v217 = vadd.f32 %v214, 1.0
    %v218 = vadd.f32 %v216, 1.0
    %v219 = vrcp.pop %v217
    %v220 = vmul.f32 1.0, %v219
    %v221 = vrcp.pop %v218
    %v222 = vmul.f32 1.0, %v221
    %223 = vset.pattern.permute.xlu0 12
    %224 = vperm.xlu0 %223, %v42
    %v225 = vpop.permute.xlu0 %224
    %v226 = vrot.slane %v42, 4
    %v227 = vrot.slane %v225, 4
    %vm229 = vcmask 97280
    %v230 = vsel %vm229, %v226, 0
    %vm232 = vcmask 1043456
    %v234 = vsel %vm232, %v222, 0
    %236 = vmatprep.subr.mxu0 0.0
    %237 = vmatpush1.msra.mxu0 %v220
    %238 = vmatprep.subr.mxu0 0.0
    %239 = vmatpush1.msra.mxu0 %v234
    %240 = vmatprep.subr.mxu0 0.0
    %241 = vmatpush1.msra.mxu0 0.0
    %242 = vmatprep.subr.mxu0 0.0
    %243 = vmatpush1.msra.mxu0 0.0
    %244 = vmatprep.subr.mxu0 0.0
    %245 = vmatpush1.msra.mxu0 0.0
    %246 = vmatprep.subr.mxu0 0.0
    %247 = vmatpush1.msra.mxu0 0.0
    %248 = vmatprep.subr.mxu0 0.0
    %249 = vmatpush1.msra.mxu0 0.0
    %250 = vmatprep.subr.mxu0 0.0
    %251 = vmatpush1.msra.mxu0 0.0
    %252 = vmatprep.subr.mxu0 0.0
    %253 = vmatpush1.msra.mxu0 0.0
    %254 = vmatprep.subr.mxu0 0.0
    %255 = vmatpush1.msra.mxu0 0.0
    %256 = vmatprep.subr.mxu0 0.0
    %257 = vmatpush1.msra.mxu0 0.0
    %258 = vmatprep.subr.mxu0 0.0
    %259 = vmatpush1.msra.mxu0 0.0
    %260 = vmatprep.subr.mxu0 0.0
    %261 = vmatpush1.msra.mxu0 0.0
    %262 = vmatprep.subr.mxu0 0.0
    %263 = vmatpush1.msra.mxu0 0.0
    %264 = vmatprep.subr.mxu0 0.0
    %265 = vmatpush1.msra.mxu0 0.0
    %266 = vmatprep.subr.mxu0 0.0
    %267 = vmatpush1.msra.mxu0 0.0
    %268 = vmatprep.subr.mxu0 0.0
    %269 = vmatpush1.msra.mxu0 0.0
    %270 = vmatprep.subr.mxu0 0.0
    %271 = vmatpush1.msra.mxu0 0.0
    %272 = vmatprep.subr.mxu0 0.0
    %273 = vmatpush1.msra.mxu0 0.0
    %274 = vmatprep.subr.mxu0 0.0
    %275 = vmatpush1.msra.mxu0 0.0
    %276 = vmatprep.subr.mxu0 0.0
    %277 = vmatpush1.msra.mxu0 0.0
    %278 = vmatprep.subr.mxu0 0.0
    %279 = vmatpush1.msra.mxu0 0.0
    %280 = vmatprep.subr.mxu0 0.0
    %281 = vmatpush1.msra.mxu0 0.0
    %282 = vmatprep.subr.mxu0 0.0
    %283 = vmatpush1.msra.mxu0 0.0
    %284 = vmatprep.subr.mxu0 0.0
    %285 = vmatpush1.msra.mxu0 0.0
    %286 = vmatprep.subr.mxu0 0.0
    %287 = vmatpush1.msra.mxu0 0.0
    %288 = vmatprep.subr.mxu0 0.0
    %289 = vmatpush1.msra.mxu0 0.0
    %290 = vmatprep.subr.mxu0 0.0
    %291 = vmatpush1.msra.mxu0 0.0
    %292 = vmatprep.subr.mxu0 0.0
    %293 = vmatpush1.msra.mxu0 0.0
    %294 = vmatprep.subr.mxu0 0.0
    %295 = vmatpush1.msra.mxu0 0.0
    %296 = vmatprep.subr.mxu0 0.0
    %297 = vmatpush1.msra.mxu0 0.0
    %298 = vmatprep.subr.mxu0 0.0
    %299 = vmatpush1.msra.mxu0 0.0
    %300 = vmatprep.mubr.f32.mxu0 0.0
    %301 = vmatmul.mubr.f32.gmra.mrb[0].mxu0 %v230
    %v302 = vpop.f32.mrb[0].mxu0
    %v303 = vadd.f32 %v227, %v302
    %v304 = vpop.f32.mrb[0].mxu0
    %305 = vdwg.mxu0
    %vm306 = vcmask 58368
    %307 = vst.msk [vmem:[#allocation7] sm:$0x3] %vm306, %v303
    // Predicated region
    $region18: #{tpu_custom_call.1} parent=1 // pred_check
      _
    $region19: #{tpu_custom_call.1} parent=1 // pred_check_branch
      %309 = sbr.rel (0) target = $region21
    $region20: #{tpu_custom_call.1} parent=1 // pred_region
      %s311 = ssub.s32 32, 32
      %312 = vsyncadd [#allocation4], %s311
      %s314 = sshll.u32 [#allocation7], 4
      %s315 = int_to_ptr.vmem [resolvable:$true] %s314
      %317 = dma.vmem_to_hbm [thread:$0]  %s315, 32, %s2, [#allocation4]
    $region21: #{tpu_custom_call.1} parent=1 // pred_fallthru
      _
    // Predicated region
    $region22: #{tpu_custom_call.1} parent=1 // pred_check
      _
    $region23: #{tpu_custom_call.1} parent=1 // pred_check_branch
      %319 = sbr.rel (0) target = $region25
    $region24: #{tpu_custom_call.1} parent=1 // pred_region
      %320 = dma.done [#allocation4], 32
    $region25: #{tpu_custom_call.1} parent=1 // pred_fallthru
      _
    %321 = vsyncpa [#allocation3], 1
    %322 = vsyncpa [#allocation6], 1
    %323 = vsyncpa [#allocation4], 1

</llo_original>
